<compile_context>
chip_gen: v5e
topology: v5e:2x2
jax: 0.10.0
libtpu: 0.0.40
codegen_flags: <defaults>
</compile_context>

<pallas_src>
import functools

import jax
import jax.numpy as jnp
from jax import lax
from jax.experimental import pallas as pl
from jax.experimental.pallas import tpu as pltpu

BN_EPS = 1e-5
H_DTYPE = jnp.bfloat16  # dtype of the intermediate h on its HBM round-trip


# ----------------------------------------------------------------------------
# Pass 1: Linear1 + batch-statistics accumulation + BN-affine finalize
# ----------------------------------------------------------------------------
def _linear1_stats_kernel(x_ref, w1_ref, gb_ref, h_ref, ss_ref, *, inv_batch):
    """h = x @ W1 (bf16 MXU, f32 acc); accumulate per-feature sum / sum-of-squares.

    The (2, H) `ss_ref` output maps to the same block for every grid step, so
    it stays resident in VMEM across the whole (arbitrary) batch axis and acts
    as the accumulator.  On the last step it is overwritten in place with the
    fused BN affine: row 0 = s = gamma*rsqrt(var+eps), row 1 = t = beta - mean*s.
    """
    i = pl.program_id(0)
    nb = pl.num_programs(0)

    h = jnp.dot(x_ref[...].astype(jnp.bfloat16),
                w1_ref[...].astype(jnp.bfloat16),
                preferred_element_type=jnp.float32)
    h_ref[...] = h.astype(h_ref.dtype)

    @pl.when(i == 0)
    def _():
        ss_ref[...] = jnp.zeros_like(ss_ref)

    ss_ref[...] += jnp.concatenate(
        [jnp.sum(h, axis=0, keepdims=True),        # sum
         jnp.sum(h * h, axis=0, keepdims=True)],   # sum of squares
        axis=0)

    @pl.when(i == nb - 1)
    def _():
        sums = ss_ref[...]
        mean = sums[0:1, :] * inv_batch
        var = jnp.maximum(sums[1:2, :] * inv_batch - mean * mean, 0.0)
        s = gb_ref[0:1, :] * lax.rsqrt(var + BN_EPS)   # gamma / sqrt(var+eps)
        t = gb_ref[1:2, :] - mean * s                  # beta - mean * s
        ss_ref[...] = jnp.concatenate([s, t], axis=0)


# ----------------------------------------------------------------------------
# Pass 2: fused BN affine + ReLU + Linear2
# ----------------------------------------------------------------------------
def _bn_relu_linear2_kernel(ss_ref, h_ref, w2_ref, b2_ref, out_ref):
    s = ss_ref[0:1, :]
    t = ss_ref[1:2, :]
    # fused normalize + affine + ReLU in f32 (bf16 VPU not available on v5e)
    hn = jnp.maximum(h_ref[...].astype(jnp.float32) * s + t, 0.0)
    y = jnp.dot(hn.astype(jnp.bfloat16),
                w2_ref[...].astype(jnp.bfloat16),
                preferred_element_type=jnp.float32) + b2_ref[...]
    out_ref[...] = y.astype(out_ref.dtype)


# ----------------------------------------------------------------------------
# Wrapper
# ----------------------------------------------------------------------------
def _pick_batch_tile(batch, max_tile=512):
    if batch <= max_tile:
        return batch
    for tb in range(max_tile, 7, -8):          # largest multiple-of-8 divisor
        if batch % tb == 0:
            return tb
    return batch                               # fallback: single tile


def projection_head(x, w1, gamma_beta, w2, b2, *, block_b=None):
    """x: (B, in_dim) f32. Returns (B, out_dim) f32.

    Linear1's bias is intentionally NOT an input — with training-mode
    BatchNorm directly after it, the bias cancels exactly in (h - mean).
    Weights may be passed as bf16 to skip the in-kernel cast.
    """
    B, in_dim = x.shape
    hidden = w1.shape[1]
    out_dim = w2.shape[1]

    tb = block_b if block_b is not None else _pick_batch_tile(B)
    assert B % tb == 0, "batch must be divisible by the batch tile"
    grid = (B // tb,)

    vmem_limit = 32 * 1024 * 1024  # safe on v5e/v6e (128 MiB) and v7x (64 MiB)
    params_reduce = pltpu.CompilerParams(
        dimension_semantics=("arbitrary",), vmem_limit_bytes=vmem_limit)
    params_parallel = pltpu.CompilerParams(
        dimension_semantics=("parallel",), vmem_limit_bytes=vmem_limit)

    # ---- Pass 1: h = x @ W1 (bf16 intermediate) + fused BN scale/shift ------
    h, scale_shift = pl.pallas_call(
        functools.partial(_linear1_stats_kernel, inv_batch=1.0 / B),
        out_shape=(jax.ShapeDtypeStruct((B, hidden), H_DTYPE),
                   jax.ShapeDtypeStruct((2, hidden), jnp.float32)),
        grid=grid,
        in_specs=[
            pl.BlockSpec((tb, in_dim), lambda i: (i, 0)),       # x tile
            pl.BlockSpec((in_dim, hidden), lambda i: (0, 0)),   # W1 (resident)
            pl.BlockSpec((2, hidden), lambda i: (0, 0)),        # gamma/beta
        ],
        out_specs=(
            pl.BlockSpec((tb, hidden), lambda i: (i, 0)),       # h tile (bf16)
            pl.BlockSpec((2, hidden), lambda i: (0, 0)),        # [s; t] accumulator
        ),
        compiler_params=params_reduce,
    )(x, w1, gamma_beta)

    # ---- Pass 2: h * s + t, ReLU, Linear2 ------------------------------------
    out = pl.pallas_call(
        _bn_relu_linear2_kernel,
        out_shape=jax.ShapeDtypeStruct((B, out_dim), jnp.float32),
        grid=grid,
        in_specs=[
            pl.BlockSpec((2, hidden), lambda i: (0, 0)),        # [s; t]
            pl.BlockSpec((tb, hidden), lambda i: (i, 0)),       # h tile
            pl.BlockSpec((hidden, out_dim), lambda i: (0, 0)),  # W2 (resident)
            pl.BlockSpec((1, out_dim), lambda i: (0, 0)),       # b2
        ],
        out_specs=pl.BlockSpec((tb, out_dim), lambda i: (i, 0)),
        compiler_params=params_parallel,
    )(scale_shift, h, w2, b2)

    return out


# ----------------------------------------------------------------------------
# Params / reference
# ----------------------------------------------------------------------------
def init_params(key, in_dim, hidden_dim, out_dim):
    """nn.Linear-style U(-1/sqrt(fan_in), 1/sqrt(fan_in)) init; BN gamma=1, beta=0."""
    k1, k2, k3, k4 = jax.random.split(key, 4)
    bound1 = 1.0 / jnp.sqrt(in_dim)
    bound2 = 1.0 / jnp.sqrt(hidden_dim)
    w1 = jax.random.uniform(k1, (in_dim, hidden_dim), jnp.float32, -bound1, bound1)
    b1 = jax.random.uniform(k2, (1, hidden_dim), jnp.float32, -bound1, bound1)
    w2 = jax.random.uniform(k3, (hidden_dim, out_dim), jnp.float32, -bound2, bound2)
    b2 = jax.random.uniform(k4, (1, out_dim), jnp.float32, -bound2, bound2)
    gamma_beta = jnp.concatenate(
        [jnp.ones((1, hidden_dim), jnp.float32),    # BatchNorm1d weight (gamma)
         jnp.zeros((1, hidden_dim), jnp.float32)],  # BatchNorm1d bias   (beta)
        axis=0)
    return dict(w1=w1, b1=b1, gamma_beta=gamma_beta, w2=w2, b2=b2)


def reference(x, w1, b1, gamma_beta, w2, b2):
    """Pure-f32 reference matching the PyTorch forward in train() mode (with b1)."""
    h = x @ w1 + b1
    mean = h.mean(0, keepdims=True)
    var = ((h - mean) ** 2).mean(0, keepdims=True)       # biased variance
    h = (h - mean) / jnp.sqrt(var + BN_EPS) * gamma_beta[0:1] + gamma_beta[1:2]
    h = jnp.maximum(h, 0.0)
    return h @ w2 + b2


if __name__ == "__main__":
    key = jax.random.PRNGKey(0)
    k_x, k_p = jax.random.split(key)

    # Small but lane-dense shapes: feature dims are multiples of 128,
    # batch is a multiple of 8 so the B-tiled grid exercises the pipeline.
    B, in_dim, hidden_dim, out_dim = 32, 128, 128, 256
    x = jax.random.normal(k_x, (B, in_dim), jnp.float32)
    p = init_params(k_p, in_dim, hidden_dim, out_dim)

    out = projection_head(x, p["w1"], p["gamma_beta"], p["w2"], p["b2"], block_b=8)
    out = jax.block_until_ready(out)

    ref = reference(x, p["w1"], p["b1"], p["gamma_beta"], p["w2"], p["b2"])
    assert out.shape == (B, out_dim)
    max_err = float(jnp.max(jnp.abs(out - ref)))
    # bf16 MXU operands + bf16 intermediate h (f32 stats/accumulation) vs pure-f32
    # reference -> loosened tolerance.
    assert jnp.allclose(out, ref, atol=3e-2, rtol=3e-2), \
        f"mismatch vs reference (max abs err {max_err})"

    print("KERNEL_OK")
</pallas_src>

<mosaic_0001>
module attributes {stable_mosaic.version = 11 : i64} {
  func.func @_linear1_stats_kernel(%arg0: i32, %arg1: memref<8x128xf32, #tpu.memory_space<vmem>>, %arg2: memref<128x128xf32, #tpu.memory_space<vmem>>, %arg3: memref<2x128xf32, #tpu.memory_space<vmem>>, %arg4: memref<8x128xbf16, #tpu.memory_space<vmem>>, %arg5: memref<2x128xf32, #tpu.memory_space<vmem>>) attributes {dimension_semantics = [#tpu.dimension_semantics<arbitrary>], iteration_bounds = array<i64: 4>, scalar_prefetch = 0 : i64, scratch_operands = 0 : i64, tpu.core_type = #tpu.core_type<tc>, window_params = [{transform_indices = @transform_0, window_bounds = array<i64: 8, 128>}, {pipeline_mode = #tpu.pipeline_mode<synchronous>, transform_indices = @transform_1, window_bounds = array<i64: 128, 128>}, {pipeline_mode = #tpu.pipeline_mode<synchronous>, transform_indices = @transform_2, window_bounds = array<i64: 2, 128>}, {transform_indices = @transform_3, window_bounds = array<i64: 8, 128>}, {pipeline_mode = #tpu.pipeline_mode<synchronous>, transform_indices = @transform_4, window_bounds = array<i64: 2, 128>}]} {
    %c0 = arith.constant 0 : index
    %c0_0 = arith.constant 0 : index
    %0 = vector.load %arg1[%c0, %c0_0] : memref<8x128xf32, #tpu.memory_space<vmem>>, vector<8x128xf32>
    %1 = arith.truncf %0 : vector<8x128xf32> to vector<8x128xbf16>
    %c0_1 = arith.constant 0 : index
    %c0_2 = arith.constant 0 : index
    %2 = vector.load %arg2[%c0_1, %c0_2] : memref<128x128xf32, #tpu.memory_space<vmem>>, vector<128x128xf32>
    %3 = arith.truncf %2 : vector<128x128xf32> to vector<128x128xbf16>
    %cst = arith.constant dense<0.000000e+00> : vector<8x128xf32>
    %4 = tpu.matmul %1, %3, %cst {dimension_numbers = #tpu.dot_dimension_numbers<[1], [0], [0], [1], [0, 0, 1, 1], [], []>} : vector<8x128xbf16>, vector<128x128xbf16>, vector<8x128xf32> -> vector<8x128xf32>
    %5 = arith.truncf %4 : vector<8x128xf32> to vector<8x128xbf16>
    %c0_3 = arith.constant 0 : index
    %c0_4 = arith.constant 0 : index
    %6 = vector.load %arg4[%c0_3, %c0_4] : memref<8x128xbf16, #tpu.memory_space<vmem>>, vector<8x128xbf16>
    tpu.vector_store %arg4[%c0_3, %c0_4], %5 {strides = array<i32>} : memref<8x128xbf16, #tpu.memory_space<vmem>>, vector<8x128xbf16>,
    %c0_i32 = arith.constant 0 : i32
    %7 = arith.cmpi eq, %arg0, %c0_i32 : i32
    %8 = arith.extui %7 : i1 to i32
    %c0_i32_5 = arith.constant 0 : i32
    %9 = arith.cmpi ne, %8, %c0_i32_5 : i32
    scf.if %9 {
      %cst_13 = arith.constant 0.000000e+00 : f32
      %22 = vector.broadcast %cst_13 : f32 to vector<2x128xf32>
      %c0_14 = arith.constant 0 : index
      %c0_15 = arith.constant 0 : index
      %23 = vector.load %arg5[%c0_14, %c0_15] : memref<2x128xf32, #tpu.memory_space<vmem>>, vector<2x128xf32>
      tpu.vector_store %arg5[%c0_14, %c0_15], %22 {strides = array<i32>} : memref<2x128xf32, #tpu.memory_space<vmem>>, vector<2x128xf32>,
    } else {
    }
    %c0_6 = arith.constant 0 : index
    %c0_7 = arith.constant 0 : index
    %10 = vector.load %arg5[%c0_6, %c0_7] : memref<2x128xf32, #tpu.memory_space<vmem>>, vector<2x128xf32>
    %cst_8 = arith.constant dense<0.000000e+00> : vector<128xf32>
    %11 = vector.multi_reduction <add>, %4, %cst_8 [0] : vector<8x128xf32> to vector<128xf32>
    %12 = vector.shape_cast %11 : vector<128xf32> to vector<1x128xf32>
    %13 = arith.mulf %4, %4 : vector<8x128xf32>
    %cst_9 = arith.constant dense<0.000000e+00> : vector<128xf32>
    %14 = vector.multi_reduction <add>, %13, %cst_9 [0] : vector<8x128xf32> to vector<128xf32>
    %15 = vector.shape_cast %14 : vector<128xf32> to vector<1x128xf32>
    %16 = tpu.concatenate %12, %15 in 0 : vector<1x128xf32>, vector<1x128xf32> -> vector<2x128xf32>
    %17 = arith.addf %10, %16 : vector<2x128xf32>
    %c0_10 = arith.constant 0 : index
    %c0_11 = arith.constant 0 : index
    %18 = vector.load %arg5[%c0_10, %c0_11] : memref<2x128xf32, #tpu.memory_space<vmem>>, vector<2x128xf32>
    tpu.vector_store %arg5[%c0_10, %c0_11], %17 {strides = array<i32>} : memref<2x128xf32, #tpu.memory_space<vmem>>, vector<2x128xf32>,
    %c3_i32 = arith.constant 3 : i32
    %19 = arith.cmpi eq, %arg0, %c3_i32 : i32
    %20 = arith.extui %19 : i1 to i32
    %c0_i32_12 = arith.constant 0 : i32
    %21 = arith.cmpi ne, %20, %c0_i32_12 : i32
    scf.if %21 {
      %c0_13 = arith.constant 0 : index
      %c0_14 = arith.constant 0 : index
      %22 = vector.load %arg5[%c0_13, %c0_14] : memref<2x128xf32, #tpu.memory_space<vmem>>, vector<2x128xf32>
      %23 = vector.extract_strided_slice %22 {offsets = [0, 0], sizes = [1, 128], strides = [1, 1]} : vector<2x128xf32> to vector<1x128xf32>
      %cst_15 = arith.constant 3.125000e-02 : f32
      %24 = vector.broadcast %cst_15 : f32 to vector<1x128xf32>
      %25 = arith.mulf %23, %24 : vector<1x128xf32>
      %26 = vector.extract_strided_slice %22 {offsets = [1, 0], sizes = [1, 128], strides = [1, 1]} : vector<2x128xf32> to vector<1x128xf32>
      %cst_16 = arith.constant 3.125000e-02 : f32
      %27 = vector.broadcast %cst_16 : f32 to vector<1x128xf32>
      %28 = arith.mulf %26, %27 : vector<1x128xf32>
      %29 = arith.mulf %25, %25 : vector<1x128xf32>
      %30 = arith.subf %28, %29 : vector<1x128xf32>
      %cst_17 = arith.constant 0.000000e+00 : f32
      %31 = vector.broadcast %cst_17 : f32 to vector<1x128xf32>
      %32 = arith.maximumf %30, %31 : vector<1x128xf32>
      %c0_18 = arith.constant 0 : index
      %c0_19 = arith.constant 0 : index
      %33 = vector.load %arg3[%c0_18, %c0_19] : memref<2x128xf32, #tpu.memory_space<vmem>>, vector<1x128xf32>
      %cst_20 = arith.constant 9.99999974E-6 : f32
      %34 = vector.broadcast %cst_20 : f32 to vector<1x128xf32>
      %35 = arith.addf %32, %34 : vector<1x128xf32>
      %36 = math.rsqrt %35 : vector<1x128xf32>
      %37 = arith.mulf %33, %36 : vector<1x128xf32>
      %c1 = arith.constant 1 : index
      %c0_21 = arith.constant 0 : index
      %38 = vector.load %arg3[%c1, %c0_21] : memref<2x128xf32, #tpu.memory_space<vmem>>, vector<1x128xf32>
      %39 = arith.mulf %25, %37 : vector<1x128xf32>
      %40 = arith.subf %38, %39 : vector<1x128xf32>
      %41 = tpu.concatenate %37, %40 in 0 : vector<1x128xf32>, vector<1x128xf32> -> vector<2x128xf32>
      %c0_22 = arith.constant 0 : index
      %c0_23 = arith.constant 0 : index
      %42 = vector.load %arg5[%c0_22, %c0_23] : memref<2x128xf32, #tpu.memory_space<vmem>>, vector<2x128xf32>
      tpu.vector_store %arg5[%c0_22, %c0_23], %41 {strides = array<i32>} : memref<2x128xf32, #tpu.memory_space<vmem>>, vector<2x128xf32>,
    } else {
    }
    return
  }
  func.func @transform_0(%arg0: i32) -> (i32, i32) {
    %c0_i32 = arith.constant 0 : i32
    %c0_i32_0 = arith.constant 0 : i32
    return %arg0, %c0_i32 : i32, i32
  }
  func.func @transform_1(%arg0: i32) -> (i32, i32) {
    %c0_i32 = arith.constant 0 : i32
    %c0_i32_0 = arith.constant 0 : i32
    %c0_i32_1 = arith.constant 0 : i32
    return %c0_i32, %c0_i32_0 : i32, i32
  }
  func.func @transform_2(%arg0: i32) -> (i32, i32) {
    %c0_i32 = arith.constant 0 : i32
    %c0_i32_0 = arith.constant 0 : i32
    %c0_i32_1 = arith.constant 0 : i32
    return %c0_i32, %c0_i32_0 : i32, i32
  }
  func.func @transform_3(%arg0: i32) -> (i32, i32) {
    %c0_i32 = arith.constant 0 : i32
    %c0_i32_0 = arith.constant 0 : i32
    return %arg0, %c0_i32 : i32, i32
  }
  func.func @transform_4(%arg0: i32) -> (i32, i32) {
    %c0_i32 = arith.constant 0 : i32
    %c0_i32_0 = arith.constant 0 : i32
    %c0_i32_1 = arith.constant 0 : i32
    return %c0_i32, %c0_i32_0 : i32, i32
  }
}

</mosaic_0001>

<llo_original>
// kernel: tpu_custom_call.1
$region0: #{tpu_custom_call.1}
  #allocation0 [shape = 'u32[]', space=smem, size = 0x4, offset = 0x4, fixed_abs, tag = 'smem constant byte address 0x4 - core index']
  #allocation1 [shape = 'u32[72,128]{1,0:T(1,128)}', space=vmem, size = 0x9000, scoped, tag = 'internal scratch']
  %s0 = inlined_call_operand.hbm [shape: f32[32,128], index: 0, kind: input, shape index: {}]
  %s1 = inlined_call_operand.hbm [shape: f32[128,128], index: 1, kind: input, shape index: {}]
  %s2 = inlined_call_operand.hbm [shape: f32[2,128], index: 2, kind: input, shape index: {}]
  %s3 = inlined_call_operand.hbm [shape: bf16[32,128], index: 3, kind: output, shape index: {0}]
  %s4 = inlined_call_operand.hbm [shape: f32[2,128], index: 4, kind: output, shape index: {1}]
  %5 = xla_tuple %s3, %s4
  %s6 = sld [smem:[#allocation0]]
  $region73: #{tpu_custom_call.1} parent=0
    _
  %s8 = ssub.s32 1, %s6
  %s9 = scalar_select 0, %s8, %s6
  $region1: #{tpu_custom_call.1} parent=0
    #allocation2 [shape = 'u8[8192]{0}', space=vmem, size = 0x2000, scoped, tag = 'input window, operand 0']
    #allocation3 [shape = 's32[2]{0}', space=sflag, size = 0x8, scoped, tag = 'scoped memory for tpu_custom_call.1']
    #allocation4 [shape = 's32[2]{0}', space=sflag, size = 0x8, scoped, tag = 'scoped memory for tpu_custom_call.1']
    #allocation5 [shape = 'u8[65536]{0}', space=vmem, size = 0x10000, scoped, tag = 'input window, operand 1, single buffered']
    #allocation6 [shape = 's32[1]{0}', space=sflag, size = 0x4, scoped, tag = 'scoped memory for tpu_custom_call.1']
    #allocation7 [shape = 'u8[1024]{0}', space=vmem, size = 0x400, scoped, tag = 'input window, operand 2, single buffered']
    #allocation8 [shape = 'u8[4096]{0}', space=vmem, size = 0x1000, scoped, tag = 'output window, operand 0']
    #allocation9 [shape = 'u8[1024]{0}', space=vmem, size = 0x400, scoped, tag = 'output window, operand 1, single buffered']
    #allocation10 [shape = 's32[1]{0}', space=sflag, size = 0x4, scoped, tag = 'scoped memory for tpu_custom_call.1']
    %10 = vsyncpa [#allocation3], 0
    %s11 = scalar_lea.sflag [#allocation3], 1
    %12 = vsyncpa %s11, 0
    %13 = vsyncpa [#allocation6], 0
    %14 = vsyncpa [#allocation4], 0
    %s15 = scalar_lea.sflag [#allocation4], 1
    %16 = vsyncpa %s15, 0
    %17 = vsyncpa [#allocation10], 0
    loop: start=0, step=1, limit=6
    $region2: #{tpu_custom_call.1} parent=1 // loop_pre_header
      _
    $region3: #{tpu_custom_call.1} parent=1 // loop_header
      %s19 = sphi 0, %s23
      %p20 = scmp.ge.s32.totalorder %s19, 6
      %s29 = sphi 0, %s31
      %s32 = sphi 0, %s29
      %s33 = sphi 0, %s32
      %s49 = sphi 0, %s33
      %s53 = sphi 0, %s53
      %s55 = sphi 0, %s53
      %s56 = sphi 0, %s55
      %s70 = sphi 0, %s56
      %s74 = sphi 0, %s74
      %s76 = sphi 0, %s74
      %s77 = sphi 0, %s76
      %s91 = sphi 0, %s77
      %s97 = sphi 0, %s99
      %s100 = sphi 0, %s97
      %s101 = sphi 0, %s100
      %s117 = sphi 0, %s101
      %s121 = sphi 0, %s121
      %s123 = sphi 0, %s121
      %s124 = sphi 0, %s123
      %s138 = sphi 0, %s124
    $region4: #{tpu_custom_call.1} parent=1 // loop_header_branch
      %22 = sbr.rel (%p20) target = $region8
    $region5: #{tpu_custom_call.1} parent=1 // loop_body
      %s24 = ssub.s32 %s19, 1
      %s25 = ssub.s32 %s19, 2
      %s26 = sadd.s32 %s19, 1
      %s27 = ssub.s32 %s19, %s26
      %p28 = scmp.eq.s32.totalorder %s27, 0
      %s30 = sadd.s32 %s29, 1
      %s31 = scalar_select %p28, %s29, %s30
      %p34 = pneg %p28
      %p35 = scmp.eq.s32.totalorder %s19, 3
      %p36 = por %p34, %p35
      %p37 = scmp.ne.s32.totalorder %s29, %s32
      %p38 = scmp.eq.s32.totalorder %s19, 0
      %p39 = por %p37, %p38
      %p40 = scmp.ne.s32.totalorder %s29, %s32
      %p41 = scmp.eq.s32.totalorder %s24, 3
      %p42 = por %p40, %p41
      %p43 = scmp.ne.s32.totalorder %s32, %s33
      %p44 = scmp.eq.s32.totalorder %s24, 0
      %p45 = por %p43, %p44
      %p46 = scmp.ne.s32.totalorder %s32, %s33
      %p47 = scmp.eq.s32.totalorder %s25, 3
      %p48 = por %p46, %p47
      %p50 = scmp.ne.s32.totalorder %s33, %s49
      %p51 = scmp.eq.s32.totalorder %s25, 0
      %p52 = por %p50, %p51
      %s54 = sadd.s32 %s53, 1
      %p57 = scmp.eq.s32.totalorder %s19, 3
      %p58 = scmp.ne.s32.totalorder %s53, %s55
      %p59 = scmp.eq.s32.totalorder %s19, 0
      %p60 = por %p58, %p59
      %p61 = scmp.ne.s32.totalorder %s53, %s55
      %p62 = scmp.eq.s32.totalorder %s24, 3
      %p63 = por %p61, %p62
      %p64 = scmp.ne.s32.totalorder %s55, %s56
      %p65 = scmp.eq.s32.totalorder %s24, 0
      %p66 = por %p64, %p65
      %p67 = scmp.ne.s32.totalorder %s55, %s56
      %p68 = scmp.eq.s32.totalorder %s25, 3
      %p69 = por %p67, %p68
      %p71 = scmp.ne.s32.totalorder %s56, %s70
      %p72 = scmp.eq.s32.totalorder %s25, 0
      %p73 = por %p71, %p72
      %s75 = sadd.s32 %s74, 1
      %p78 = scmp.eq.s32.totalorder %s19, 3
      %p79 = scmp.ne.s32.totalorder %s74, %s76
      %p80 = scmp.eq.s32.totalorder %s19, 0
      %p81 = por %p79, %p80
      %p82 = scmp.ne.s32.totalorder %s74, %s76
      %p83 = scmp.eq.s32.totalorder %s24, 3
      %p84 = por %p82, %p83
      %p85 = scmp.ne.s32.totalorder %s76, %s77
      %p86 = scmp.eq.s32.totalorder %s24, 0
      %p87 = por %p85, %p86
      %p88 = scmp.ne.s32.totalorder %s76, %s77
      %p89 = scmp.eq.s32.totalorder %s25, 3
      %p90 = por %p88, %p89
      %p92 = scmp.ne.s32.totalorder %s77, %s91
      %p93 = scmp.eq.s32.totalorder %s25, 0
      %p94 = por %p92, %p93
      %s95 = ssub.s32 %s19, %s26
      %p96 = scmp.eq.s32.totalorder %s95, 0
      %s98 = sadd.s32 %s97, 1
      %s99 = scalar_select %p96, %s97, %s98
      %p102 = pneg %p96
      %p103 = scmp.eq.s32.totalorder %s19, 3
      %p104 = por %p102, %p103
      %p105 = scmp.ne.s32.totalorder %s97, %s100
      %p106 = scmp.eq.s32.totalorder %s19, 0
      %p107 = por %p105, %p106
      %p108 = scmp.ne.s32.totalorder %s97, %s100
      %p109 = scmp.eq.s32.totalorder %s24, 3
      %p110 = por %p108, %p109
      %p111 = scmp.ne.s32.totalorder %s100, %s101
      %p112 = scmp.eq.s32.totalorder %s24, 0
      %p113 = por %p111, %p112
      %p114 = scmp.ne.s32.totalorder %s100, %s101
      %p115 = scmp.eq.s32.totalorder %s25, 3
      %p116 = por %p114, %p115
      %p118 = scmp.ne.s32.totalorder %s101, %s117
      %p119 = scmp.eq.s32.totalorder %s25, 0
      %p120 = por %p118, %p119
      %s122 = sadd.s32 %s121, 1
      %p125 = scmp.eq.s32.totalorder %s19, 3
      %p126 = scmp.ne.s32.totalorder %s121, %s123
      %p127 = scmp.eq.s32.totalorder %s19, 0
      %p128 = por %p126, %p127
      %p129 = scmp.ne.s32.totalorder %s121, %s123
      %p130 = scmp.eq.s32.totalorder %s24, 3
      %p131 = por %p129, %p130
      %p132 = scmp.ne.s32.totalorder %s123, %s124
      %p133 = scmp.eq.s32.totalorder %s24, 0
      %p134 = por %p132, %p133
      %p135 = scmp.ne.s32.totalorder %s123, %s124
      %p136 = scmp.eq.s32.totalorder %s25, 3
      %p137 = por %p135, %p136
      %p139 = scmp.ne.s32.totalorder %s124, %s138
      %p140 = scmp.eq.s32.totalorder %s25, 0
      %p141 = por %p139, %p140
      %p142 = scmp.le.s32.totalorder 1, %s19
      %p143 = scmp.lt.s32.totalorder %s19, 5
      %p144 = pnand %p142, %p143
      %p145 = pneg %p144
      // Predicated region
      $region9: #{tpu_custom_call.1} parent=5 // pred_check
        _
      $region10: #{tpu_custom_call.1} parent=5 // pred_check_branch
        %147 = sbr.rel (%p144) target = $region12
      $region11: #{tpu_custom_call.1} parent=5 // pred_region
        %s148 = ssub.s32 %s19, 1
        // Predicated region
        $region13: #{tpu_custom_call.1} parent=11 // pred_check
          %p149 = pneg %p66
        $region14: #{tpu_custom_call.1} parent=11 // pred_check_branch
          %151 = sbr.rel (%p149) target = $region16
        $region15: #{tpu_custom_call.1} parent=11 // pred_region
          %153 = vsyncadd [#allocation6], 0
          %s154 = sshll.u32 %s1, 4
          %s155 = int_to_ptr.hbm [resolvable:$true] %s154
          %s156 = sshll.u32 [#allocation5], 4
          %s157 = int_to_ptr.vmem [resolvable:$true] %s156
          %162 = dma.hbm_to_vmem [thread:$0]  %s155, 2048, %s157, [#allocation6], 128, 128, 8
        $region16: #{tpu_custom_call.1} parent=11 // pred_fallthru
          _
        // Predicated region
        $region17: #{tpu_custom_call.1} parent=11 // pred_check
          %p163 = pneg %p87
        $region18: #{tpu_custom_call.1} parent=11 // pred_check_branch
          %165 = sbr.rel (%p163) target = $region20
        $region19: #{tpu_custom_call.1} parent=11 // pred_region
          %167 = vsyncadd [#allocation6], 0
          %s169 = sshll.u32 %s2, 4
          %s170 = int_to_ptr.hbm [resolvable:$true] %s169
          %s171 = sshll.u32 [#allocation7], 4
          %s172 = int_to_ptr.vmem [resolvable:$true] %s171
          %174 = dma.hbm_to_vmem [thread:$0]  %s170, 32, %s172, [#allocation6]
        $region20: #{tpu_custom_call.1} parent=11 // pred_fallthru
          _
      $region12: #{tpu_custom_call.1} parent=5 // pred_fallthru
        _
      %p175 = scmp.lt.s32.totalorder %s19, 4
      // Predicated region
      $region21: #{tpu_custom_call.1} parent=5 // pred_check
        %p176 = pneg %p175
      $region22: #{tpu_custom_call.1} parent=5 // pred_check_branch
        %178 = sbr.rel (%p176) target = $region24
      $region23: #{tpu_custom_call.1} parent=5 // pred_region
        // Predicated region
        $region25: #{tpu_custom_call.1} parent=23 // pred_check
          %p179 = pneg %p39
        $region26: #{tpu_custom_call.1} parent=23 // pred_check_branch
          %181 = sbr.rel (%p179) target = $region28
        $region27: #{tpu_custom_call.1} parent=23 // pred_region
          %s182 = sand.u32 %s29, 1
          %s183 = scalar_lea.sflag [#allocation3], %s182
          %s184 = sand.u32 %s29, 1
          %s185 = smul.addr %s184, 8
          %s186 = scalar_lea.vmem [#allocation2], %s185
          %188 = vsyncadd %s183, 0
          %s189 = smul.addr %s19, 8
          %s190 = scalar_lea.hbm %s0, %s189
          %s192 = sshll.u32 %s190, 4
          %s193 = int_to_ptr.hbm [resolvable:$true] %s192
          %s194 = sshll.u32 %s186, 4
          %s195 = int_to_ptr.vmem [resolvable:$true] %s194
          %197 = dma.hbm_to_vmem [thread:$0]  %s193, 128, %s195, %s183
        $region28: #{tpu_custom_call.1} parent=23 // pred_fallthru
          _
      $region24: #{tpu_custom_call.1} parent=5 // pred_fallthru
        _
      %p198 = scmp.le.s32.totalorder 1, %s19
      %p199 = scmp.lt.s32.totalorder %s19, 5
      %p200 = pnand %p198, %p199
      %p201 = pneg %p200
      // Predicated region
      $region29: #{tpu_custom_call.1} parent=5 // pred_check
        _
      $region30: #{tpu_custom_call.1} parent=5 // pred_check_branch
        %203 = sbr.rel (%p200) target = $region32
      $region31: #{tpu_custom_call.1} parent=5 // pred_region
        %s204 = ssub.s32 %s19, 1
        %s205 = sand.u32 %s32, 1
        %s206 = scalar_lea.sflag [#allocation3], %s205
        %s207 = sand.u32 %s32, 1
        %s208 = smul.addr %s207, 8
        %s209 = scalar_lea.vmem [#allocation2], %s208
        // Predicated region
        $region33: #{tpu_custom_call.1} parent=31 // pred_check
          %p210 = pneg %p45
        $region34: #{tpu_custom_call.1} parent=31 // pred_check_branch
          %212 = sbr.rel (%p210) target = $region36
        $region35: #{tpu_custom_call.1} parent=31 // pred_region
          %214 = dma.done %s206, 128
        $region36: #{tpu_custom_call.1} parent=31 // pred_fallthru
          _
        // Predicated region
        $region37: #{tpu_custom_call.1} parent=31 // pred_check
          %p215 = pneg %p66
        $region38: #{tpu_custom_call.1} parent=31 // pred_check_branch
          %217 = sbr.rel (%p215) target = $region40
        $region39: #{tpu_custom_call.1} parent=31 // pred_region
          %219 = dma.done [#allocation6], 2048
        $region40: #{tpu_custom_call.1} parent=31 // pred_fallthru
          _
        // Predicated region
        $region41: #{tpu_custom_call.1} parent=31 // pred_check
          %p220 = pneg %p87
        $region42: #{tpu_custom_call.1} parent=31 // pred_check_branch
          %222 = sbr.rel (%p220) target = $region44
        $region43: #{tpu_custom_call.1} parent=31 // pred_region
          %224 = dma.done [#allocation6], 32
        $region44: #{tpu_custom_call.1} parent=31 // pred_fallthru
          _
        %s225 = sand.u32 %s32, 1
        %s226 = scalar_lea.sflag [#allocation3], %s225
        %s227 = sand.u32 %s32, 1
        %s228 = smul.addr %s227, 8
        %s229 = scalar_lea.vmem [#allocation2], %s228
        %p230 = pneg %p45
        %p231 = pneg %p42
        %p232 = pneg %p66
        %p233 = pneg %p63
        %p234 = pneg %p87
        %p235 = pneg %p84
        %p236 = pneg %p113
        %p237 = pneg %p110
        %s238 = sand.u32 %s100, 1
        %s239 = scalar_lea.sflag [#allocation4], %s238
        %s240 = sand.u32 %s100, 1
        %s241 = smul.addr %s240, 4
        %s242 = scalar_lea.vmem [#allocation8], %s241
        %p243 = pneg %p134
        %p244 = pneg %p131
        %v245 = vld [vmem:[%s209] sm:$0xff]
        %v246 = vpack.c.bf16 %v245, %v245
        %v247 = vld [vmem:[#allocation5] sm:$0xff]
        %v248 = vld [vmem:[#allocation5 + $0x8] sm:$0xff]
        %v249 = vld [vmem:[#allocation5 + $0x10] sm:$0xff]
        %v250 = vld [vmem:[#allocation5 + $0x18] sm:$0xff]
        %v251 = vld [vmem:[#allocation5 + $0x20] sm:$0xff]
        %v252 = vld [vmem:[#allocation5 + $0x28] sm:$0xff]
        %v253 = vld [vmem:[#allocation5 + $0x30] sm:$0xff]
        %v254 = vld [vmem:[#allocation5 + $0x38] sm:$0xff]
        %v255 = vld [vmem:[#allocation5 + $0x40] sm:$0xff]
        %v256 = vld [vmem:[#allocation5 + $0x48] sm:$0xff]
        %v257 = vld [vmem:[#allocation5 + $0x50] sm:$0xff]
        %v258 = vld [vmem:[#allocation5 + $0x58] sm:$0xff]
        %v259 = vld [vmem:[#allocation5 + $0x60] sm:$0xff]
        %v260 = vld [vmem:[#allocation5 + $0x68] sm:$0xff]
        %v261 = vld [vmem:[#allocation5 + $0x70] sm:$0xff]
        %v262 = vld [vmem:[#allocation5 + $0x78] sm:$0xff]
        %v263 = vpack.c.bf16 %v248, %v247
        %v264 = vpack.c.bf16 %v250, %v249
        %v265 = vpack.c.bf16 %v252, %v251
        %v266 = vpack.c.bf16 %v254, %v253
        %v267 = vpack.c.bf16 %v256, %v255
        %v268 = vpack.c.bf16 %v258, %v257
        %v269 = vpack.c.bf16 %v260, %v259
        %v270 = vpack.c.bf16 %v262, %v261
        %271 = vmatpush.bf16.msra.mxu0 %v270
        %272 = vmatpush.bf16.msra.mxu0 %v269
        %273 = vmatpush.bf16.msra.mxu0 %v268
        %274 = vmatpush.bf16.msra.mxu0 %v267
        %275 = vmatpush.bf16.msra.mxu0 %v266
        %276 = vmatpush.bf16.msra.mxu0 %v265
        %277 = vmatpush.bf16.msra.mxu0 %v264
        %278 = vmatpush.bf16.msra.mxu0 %v263
        %279 = vmatmul.bf16.gmra.mxu0 %v246
        %v280 = vpop.f32.mrf.mxu0
        %v281 = vadd.f32 0.0, %v280
        %v282 = vpop.f32.mrf.mxu0
        %283 = vdwg.mxu0
        %v284 = vpack.c.bf16 %v281, %v281
        %285 = vst [vmem:[%s242] sm:$0xf] %v284
        %p286 = scmp.eq.s32.totalorder %s24, 0
        // Predicated region
        $region45: #{tpu_custom_call.1} parent=31 // pred_check
          %p287 = pneg %p286
        $region46: #{tpu_custom_call.1} parent=31 // pred_check_branch
          %289 = sbr.rel (%p287) target = $region48
        $region47: #{tpu_custom_call.1} parent=31 // pred_region
          %290 = vst [vmem:[#allocation9] sm:$0x3] 0.0
        $region48: #{tpu_custom_call.1} parent=31 // pred_fallthru
          _
        %v291 = vld [vmem:[#allocation9] sm:$0x3]
        %v292 = vrot.slane %v281, 4
        %v293 = vadd.f32 %v281, %v292
        %v294 = vrot.slane %v293, 2
        %v295 = vadd.f32 %v293, %v294
        %v296 = vrot.slane %v295, 1
        %v297 = vadd.f32 %v295, %v296
        %v298 = vmul.f32 %v281, %v281
        %v299 = vrot.slane %v298, 4
        %v300 = vadd.f32 %v298, %v299
        %v301 = vrot.slane %v300, 2
        %v302 = vadd.f32 %v300, %v301
        %v303 = vrot.slane %v302, 1
        %v304 = vadd.f32 %v302, %v303
        %vm305 = vcmask 1040384
        %v306 = vsel %vm305, %v297, %v304
        %v307 = vadd.f32 %v291, %v306
        %308 = vst [vmem:[#allocation9] sm:$0x3] %v307
        %p309 = scmp.eq.s32.totalorder %s24, 3
        // Predicated region
        $region49: #{tpu_custom_call.1} parent=31 // pred_check
          %p310 = pneg %p309
        $region50: #{tpu_custom_call.1} parent=31 // pred_check_branch
          %312 = sbr.rel (%p310) target = $region52
        $region51: #{tpu_custom_call.1} parent=31 // pred_region
          %v313 = vld [vmem:[#allocation9] sm:$0x3]
          %v314 = vmul.f32 %v313, 0.03125
          %v315 = vmul.f32 %v314, %v314
          %v317 = vrot.slane %v315, 7
          %v319 = vsub.f32 %v314, %v317
          %v320 = vmax.f32 %v319, 0.0
          %v321 = vld [vmem:[#allocation7] sm:$0x1]
          %v322 = vadd.f32 %v320, 1e-05
          %v323 = vrsqrt.pop %v322
          %v324 = vmul.f32 %v323, %v322
          %v325 = vmul.f32 %v324, %v323
          %v326 = vmul.f32 0.5, %v325
          %v327 = vsub.f32 1.5, %v326
          %v328 = vmul.f32 %v323, %v327
          %vm329 = vweird.f32 %v322
          %vm330 = vweird.f32 %v323
          %vm331 = vmor %vm329, %vm330
          %v332 = vsel %vm331, %v323, %v328
          %v334 = vrot.slane %v332, 1
          %v336 = vmul.f32 %v321, %v334
          %v337 = vld [vmem:[#allocation7 + $0x1] sm:$0x1]
          %v338 = vmul.f32 %v314, %v336
          %v339 = vsub.f32 %v337, %v338
          %v341 = vrot.slane %v339, 7
          %v343 = vsel %vm305, %v336, %v341
          %344 = vst [vmem:[#allocation9] sm:$0x3] %v343
        $region52: #{tpu_custom_call.1} parent=31 // pred_fallthru
          _
        %s345 = sand.u32 %s100, 1
        %s346 = scalar_lea.sflag [#allocation4], %s345
        %s347 = sand.u32 %s100, 1
        %s348 = smul.addr %s347, 4
        %s349 = scalar_lea.vmem [#allocation8], %s348
        // Predicated region
        $region53: #{tpu_custom_call.1} parent=31 // pred_check
          %p350 = pneg %p110
        $region54: #{tpu_custom_call.1} parent=31 // pred_check_branch
          %352 = sbr.rel (%p350) target = $region56
        $region55: #{tpu_custom_call.1} parent=31 // pred_region
          %354 = vsyncadd %s346, 0
          %s355 = smul.addr %s24, 4
          %s356 = scalar_lea.hbm %s3, %s355
          %s358 = sshll.u32 %s349, 4
          %s359 = int_to_ptr.vmem [resolvable:$true] %s358
          %s360 = sshll.u32 %s356, 4
          %s361 = int_to_ptr.hbm [resolvable:$true] %s360
          %363 = dma.vmem_to_hbm [thread:$0]  %s359, 64, %s361, %s346
        $region56: #{tpu_custom_call.1} parent=31 // pred_fallthru
          _
        // Predicated region
        $region57: #{tpu_custom_call.1} parent=31 // pred_check
          %p364 = pneg %p131
        $region58: #{tpu_custom_call.1} parent=31 // pred_check_branch
          %366 = sbr.rel (%p364) target = $region60
        $region59: #{tpu_custom_call.1} parent=31 // pred_region
          %368 = vsyncadd [#allocation10], 0
          %s370 = sshll.u32 [#allocation9], 4
          %s371 = int_to_ptr.vmem [resolvable:$true] %s370
          %s372 = sshll.u32 %s4, 4
          %s373 = int_to_ptr.hbm [resolvable:$true] %s372
          %375 = dma.vmem_to_hbm [thread:$0]  %s371, 32, %s373, [#allocation10]
        $region60: #{tpu_custom_call.1} parent=31 // pred_fallthru
          _
        // Predicated region
        $region61: #{tpu_custom_call.1} parent=31 // pred_check
          %p376 = pneg %p131
        $region62: #{tpu_custom_call.1} parent=31 // pred_check_branch
          %378 = sbr.rel (%p376) target = $region64
        $region63: #{tpu_custom_call.1} parent=31 // pred_region
          %380 = dma.done [#allocation10], 32
        $region64: #{tpu_custom_call.1} parent=31 // pred_fallthru
          _
      $region32: #{tpu_custom_call.1} parent=5 // pred_fallthru
        _
      %p381 = scmp.le.s32.totalorder 2, %s19
      // Predicated region
      $region65: #{tpu_custom_call.1} parent=5 // pred_check
        %p382 = pneg %p381
      $region66: #{tpu_custom_call.1} parent=5 // pred_check_branch
        %384 = sbr.rel (%p382) target = $region68
      $region67: #{tpu_custom_call.1} parent=5 // pred_region
        %s385 = ssub.s32 %s19, 2
        // Predicated region
        $region69: #{tpu_custom_call.1} parent=67 // pred_check
          %p386 = pneg %p116
        $region70: #{tpu_custom_call.1} parent=67 // pred_check_branch
          %388 = sbr.rel (%p386) target = $region72
        $region71: #{tpu_custom_call.1} parent=67 // pred_region
          %s389 = sand.u32 %s101, 1
          %s390 = scalar_lea.sflag [#allocation4], %s389
          %s391 = sand.u32 %s101, 1
          %s392 = smul.addr %s391, 4
          %s393 = scalar_lea.vmem [#allocation8], %s392
          %395 = dma.done %s390, 64
        $region72: #{tpu_custom_call.1} parent=67 // pred_fallthru
          _
      $region68: #{tpu_custom_call.1} parent=5 // pred_fallthru
        _
    $region6: #{tpu_custom_call.1} parent=1 // loop_footer
      %s23 = sadd.s32 1, %s19
    $region7: #{tpu_custom_call.1} parent=1 // loop_footer_branch
      %18 = sbr.rel target = $region3
    $region8: #{tpu_custom_call.1} parent=1 // loop_exit
      _
    %396 = vsyncpa [#allocation3], 1
    %s397 = scalar_lea.sflag [#allocation3], 1
    %398 = vsyncpa %s397, 1
    %399 = vsyncpa [#allocation6], 1
    %400 = vsyncpa [#allocation4], 1
    %s401 = scalar_lea.sflag [#allocation4], 1
    %402 = vsyncpa %s401, 1
    %403 = vsyncpa [#allocation10], 1

</llo_original>
